<compile_context>
chip_gen: v7x
topology: tpu7x:2x2x1
jax: 0.10.0
libtpu: 0.0.40
codegen_flags: <defaults>
</compile_context>

<pallas_src>
import functools

import jax
import jax.numpy as jnp
from jax.experimental import pallas as pl
from jax.experimental.pallas import tpu as pltpu

BN_EPS = 1e-5


def _vae_gmm_kernel(xin_ref, w_ref, v_ref, out_ref, *,
                    input_dim, h1, h2, latent_dim):
    """Whole VAE forward on one (B, *) tile.

    xin_ref : (B, input_dim + latent_dim)     [x | eps]
    w_ref   : (sum fan_in, 32)  row-stacked weights, columns zero-padded to 32
    v_ref   : (14, 32)          row-packed biases / BN gamma / BN beta
    out_ref : (B, input_dim + 3*latent_dim)   [x_recon | mu | logvar | z]
    """
    inv_b = 1.0 / xin_ref.shape[0]

    x = xin_ref[:, :input_dim]
    eps = xin_ref[:, input_dim:input_dim + latent_dim]

    def linear(h, w_row, fan_in, fan_out, v_row):
        w = w_ref[w_row:w_row + fan_in, :fan_out]
        b = v_ref[v_row:v_row + 1, :fan_out]
        return jnp.dot(h, w, preferred_element_type=jnp.float32) + b

    def relu_bn(h, g_row, dim):
        # ReLU then BatchNorm1d (training-mode batch stats), single reduction
        # pass: var = E[h^2] - mean^2, all fp32.
        h = jnp.maximum(h, 0.0)
        mean = jnp.sum(h, axis=0, keepdims=True) * inv_b
        var = jnp.sum(h * h, axis=0, keepdims=True) * inv_b - mean * mean
        gamma = v_ref[g_row:g_row + 1, :dim]
        beta = v_ref[g_row + 1:g_row + 2, :dim]
        return gamma * (h - mean) * jax.lax.rsqrt(var + BN_EPS) + beta

    # Weight-slab row offsets (row-stacked in fan_in order; all multiples of 8
    # for this architecture, keeping the slices sublane-aligned).
    r_w1 = 0
    r_w2 = r_w1 + input_dim
    r_wml = r_w2 + h1
    r_wd1 = r_wml + h2
    r_wd2 = r_wd1 + latent_dim
    r_wout = r_wd2 + h2

    # ---- encoder ----
    h = relu_bn(linear(x, r_w1, input_dim, h1, 0), 1, h1)
    h = relu_bn(linear(h, r_w2, h1, h2, 3), 4, h2)
    ml = linear(h, r_wml, h2, 2 * latent_dim, 6)   # fused fc_mu || fc_logvar
    mu = ml[:, :latent_dim]
    logvar = ml[:, latent_dim:]

    # ---- reparameterize ----
    z = mu + eps * jnp.exp(0.5 * logvar)

    # ---- decoder ----
    d = relu_bn(linear(z, r_wd1, latent_dim, h2, 7), 8, h2)
    d = relu_bn(linear(d, r_wd2, h2, h1, 10), 11, h1)
    x_recon = linear(d, r_wout, h1, input_dim, 13)

    # Single packed output store: [x_recon | mu | logvar | z]
    out_ref[...] = jnp.concatenate([x_recon, mu, logvar, z], axis=1)


def _pack_inputs(x, eps, params):
    """Pack activations + all parameters into 3 dense buffers (3 input DMAs)."""
    input_dim = x.shape[1]
    latent_dim = eps.shape[1]
    h1 = params["w1"].shape[1]
    h2 = params["w2"].shape[1]
    wcol = max(h1, h2, input_dim, 2 * latent_dim)   # 32 for this architecture

    def padc(a):  # pad last dim to the common column width
        return jnp.pad(a, ((0, 0), (0, wcol - a.shape[1])))

    # Fuse the two latent heads into one matmul's weight/bias.
    wml = jnp.concatenate([params["wmu"], params["wlv"]], axis=1)
    bml = jnp.concatenate([params["bmu"], params["blv"]], axis=1)

    w_slab = jnp.concatenate([
        padc(params["w1"]), padc(params["w2"]), padc(wml),
        padc(params["wd1"]), padc(params["wd2"]), padc(params["wout"]),
    ], axis=0)                                       # (152, 32)

    v_slab = jnp.concatenate([
        padc(params["b1"]), padc(params["g1"]), padc(params["be1"]),
        padc(params["b2"]), padc(params["g2"]), padc(params["be2"]),
        padc(bml),
        padc(params["bd1"]), padc(params["gd1"]), padc(params["bed1"]),
        padc(params["bd2"]), padc(params["gd2"]), padc(params["bed2"]),
        padc(params["bout"]),
    ], axis=0)                                       # (14, 32)

    xin = jnp.concatenate([x, eps], axis=1)          # (B, input_dim+latent_dim)
    return xin, w_slab, v_slab, (input_dim, h1, h2, latent_dim)


def vae_gmm_forward(x, eps, params):
    """Full VAE_GMM forward pass in one Pallas kernel.

    x:    (B, input_dim) float32
    eps:  (B, latent_dim) float32  -- the randn_like noise of reparameterize()
    Returns (x_recon, mu, logvar, z).
    """
    xin, w_slab, v_slab, (input_dim, h1, h2, latent_dim) = _pack_inputs(x, eps, params)
    B = x.shape[0]
    out_dim = input_dim + 3 * latent_dim

    vmem = pl.BlockSpec(memory_space=pltpu.MemorySpace.VMEM)
    kernel = functools.partial(_vae_gmm_kernel, input_dim=input_dim,
                               h1=h1, h2=h2, latent_dim=latent_dim)

    packed = pl.pallas_call(
        kernel,
        out_shape=jax.ShapeDtypeStruct((B, out_dim), jnp.float32),
        in_specs=[vmem, vmem, vmem],
        out_specs=vmem,
    )(xin, w_slab, v_slab)

    x_recon = packed[:, :input_dim]
    mu = packed[:, input_dim:input_dim + latent_dim]
    logvar = packed[:, input_dim + latent_dim:input_dim + 2 * latent_dim]
    z = packed[:, input_dim + 2 * latent_dim:]
    return x_recon, mu, logvar, z


def _init_params(key, input_dim, hidden_dims, latent_dim):
    """Deterministic PyTorch-Linear-style init (uniform(-1/sqrt(fan_in), ...))."""
    assert len(hidden_dims) == 2, "this synthetic kernel is specialized to 2 hidden layers"
    h1, h2 = hidden_dims

    def lin(key, fan_in, fan_out):
        kw, kb = jax.random.split(key)
        bound = 1.0 / jnp.sqrt(fan_in)
        w = jax.random.uniform(kw, (fan_in, fan_out), jnp.float32, -bound, bound)
        b = jax.random.uniform(kb, (1, fan_out), jnp.float32, -bound, bound)
        return w, b

    keys = jax.random.split(key, 8)
    p = {}
    p["w1"], p["b1"] = lin(keys[0], input_dim, h1)
    p["g1"], p["be1"] = jnp.ones((1, h1), jnp.float32), jnp.zeros((1, h1), jnp.float32)
    p["w2"], p["b2"] = lin(keys[1], h1, h2)
    p["g2"], p["be2"] = jnp.ones((1, h2), jnp.float32), jnp.zeros((1, h2), jnp.float32)
    p["wmu"], p["bmu"] = lin(keys[2], h2, latent_dim)
    p["wlv"], p["blv"] = lin(keys[3], h2, latent_dim)
    # decoder mirrors reversed(hidden_dims): latent -> h2 -> h1 -> input_dim
    p["wd1"], p["bd1"] = lin(keys[4], latent_dim, h2)
    p["gd1"], p["bed1"] = jnp.ones((1, h2), jnp.float32), jnp.zeros((1, h2), jnp.float32)
    p["wd2"], p["bd2"] = lin(keys[5], h2, h1)
    p["gd2"], p["bed2"] = jnp.ones((1, h1), jnp.float32), jnp.zeros((1, h1), jnp.float32)
    p["wout"], p["bout"] = lin(keys[6], h1, input_dim)
    return p


def _reference_forward(x, eps, p):
    """Plain-JAX reference mirroring the PyTorch module (training-mode BN)."""
    def relu_bn(h, g, be):
        h = jnp.maximum(h, 0.0)
        m = jnp.mean(h, axis=0, keepdims=True)
        v = jnp.mean((h - m) ** 2, axis=0, keepdims=True)
        return g * (h - m) / jnp.sqrt(v + BN_EPS) + be

    h = relu_bn(x @ p["w1"] + p["b1"], p["g1"], p["be1"])
    h = relu_bn(h @ p["w2"] + p["b2"], p["g2"], p["be2"])
    mu = h @ p["wmu"] + p["bmu"]
    logvar = h @ p["wlv"] + p["blv"]
    z = mu + eps * jnp.exp(0.5 * logvar)
    d = relu_bn(z @ p["wd1"] + p["bd1"], p["gd1"], p["bed1"])
    d = relu_bn(d @ p["wd2"] + p["bd2"], p["gd2"], p["bed2"])
    x_recon = d @ p["wout"] + p["bout"]
    return x_recon, mu, logvar, z


if __name__ == "__main__":
    # Small shapes consistent with the module's Linear-only forward.
    B, INPUT_DIM, HIDDEN_DIMS, LATENT_DIM = 8, 16, [32, 32], 8
    # (n_components=4 GMM parameters exist in __init__ but are unused by forward().)

    root = jax.random.PRNGKey(0)
    k_param, k_x, k_eps = jax.random.split(root, 3)

    params = _init_params(k_param, INPUT_DIM, HIDDEN_DIMS, LATENT_DIM)
    x = jax.random.normal(k_x, (B, INPUT_DIM), jnp.float32)
    eps = jax.random.normal(k_eps, (B, LATENT_DIM), jnp.float32)  # reparameterize noise

    outs = vae_gmm_forward(x, eps, params)
    outs = jax.block_until_ready(outs)

    refs = _reference_forward(x, eps, params)
    for o, r in zip(outs, refs):
        assert o.shape == r.shape and o.dtype == jnp.float32
        assert jnp.allclose(o, r, atol=1e-4, rtol=1e-4), "mismatch vs JAX reference"

    print("KERNEL_OK")
</pallas_src>

<mosaic_0001>
module attributes {stable_mosaic.version = 11 : i64} {
  func.func @_vae_gmm_kernel(%arg0: memref<8x24xf32, #tpu.memory_space<vmem>>, %arg1: memref<152x32xf32, #tpu.memory_space<vmem>>, %arg2: memref<14x32xf32, #tpu.memory_space<vmem>>, %arg3: memref<8x40xf32, #tpu.memory_space<vmem>>) attributes {dimension_semantics = [], scalar_prefetch = 0 : i64, scratch_operands = 0 : i64, tpu.core_type = #tpu.core_type<tc>} {
    %c0 = arith.constant 0 : index
    %c0_0 = arith.constant 0 : index
    %0 = vector.load %arg0[%c0, %c0_0] : memref<8x24xf32, #tpu.memory_space<vmem>>, vector<8x16xf32>
    %c0_1 = arith.constant 0 : index
    %c16 = arith.constant 16 : index
    %1 = vector.load %arg0[%c0_1, %c16] : memref<8x24xf32, #tpu.memory_space<vmem>>, vector<8x8xf32>
    %c0_2 = arith.constant 0 : index
    %c0_3 = arith.constant 0 : index
    %2 = vector.load %arg1[%c0_2, %c0_3] : memref<152x32xf32, #tpu.memory_space<vmem>>, vector<16x32xf32>
    %c0_4 = arith.constant 0 : index
    %c0_5 = arith.constant 0 : index
    %3 = vector.load %arg2[%c0_4, %c0_5] : memref<14x32xf32, #tpu.memory_space<vmem>>, vector<1x32xf32>
    %cst = arith.constant dense<0.000000e+00> : vector<8x32xf32>
    %4 = tpu.matmul %0, %2, %cst {dimension_numbers = #tpu.dot_dimension_numbers<[1], [0], [0], [1], [0, 0, 1, 1], [], []>} : vector<8x16xf32>, vector<16x32xf32>, vector<8x32xf32> -> vector<8x32xf32>
    %5 = vector.broadcast %3 : vector<1x32xf32> to vector<8x32xf32>
    %6 = arith.addf %4, %5 : vector<8x32xf32>
    %cst_6 = arith.constant 0.000000e+00 : f32
    %7 = vector.broadcast %cst_6 : f32 to vector<8x32xf32>
    %8 = arith.maximumf %6, %7 : vector<8x32xf32>
    %cst_7 = arith.constant dense<0.000000e+00> : vector<32xf32>
    %9 = vector.multi_reduction <add>, %8, %cst_7 [0] : vector<8x32xf32> to vector<32xf32>
    %10 = vector.shape_cast %9 : vector<32xf32> to vector<1x32xf32>
    %cst_8 = arith.constant 1.250000e-01 : f32
    %11 = vector.broadcast %cst_8 : f32 to vector<1x32xf32>
    %12 = arith.mulf %10, %11 : vector<1x32xf32>
    %13 = arith.mulf %8, %8 : vector<8x32xf32>
    %cst_9 = arith.constant dense<0.000000e+00> : vector<32xf32>
    %14 = vector.multi_reduction <add>, %13, %cst_9 [0] : vector<8x32xf32> to vector<32xf32>
    %15 = vector.shape_cast %14 : vector<32xf32> to vector<1x32xf32>
    %cst_10 = arith.constant 1.250000e-01 : f32
    %16 = vector.broadcast %cst_10 : f32 to vector<1x32xf32>
    %17 = arith.mulf %15, %16 : vector<1x32xf32>
    %18 = arith.mulf %12, %12 : vector<1x32xf32>
    %19 = arith.subf %17, %18 : vector<1x32xf32>
    %c1 = arith.constant 1 : index
    %c0_11 = arith.constant 0 : index
    %20 = vector.load %arg2[%c1, %c0_11] : memref<14x32xf32, #tpu.memory_space<vmem>>, vector<1x32xf32>
    %c2 = arith.constant 2 : index
    %c0_12 = arith.constant 0 : index
    %21 = vector.load %arg2[%c2, %c0_12] : memref<14x32xf32, #tpu.memory_space<vmem>>, vector<1x32xf32>
    %22 = vector.broadcast %12 : vector<1x32xf32> to vector<8x32xf32>
    %23 = arith.subf %8, %22 : vector<8x32xf32>
    %24 = vector.broadcast %20 : vector<1x32xf32> to vector<8x32xf32>
    %25 = arith.mulf %24, %23 : vector<8x32xf32>
    %cst_13 = arith.constant 9.99999974E-6 : f32
    %26 = vector.broadcast %cst_13 : f32 to vector<1x32xf32>
    %27 = arith.addf %19, %26 : vector<1x32xf32>
    %28 = math.rsqrt %27 : vector<1x32xf32>
    %29 = vector.broadcast %28 : vector<1x32xf32> to vector<8x32xf32>
    %30 = arith.mulf %25, %29 : vector<8x32xf32>
    %31 = vector.broadcast %21 : vector<1x32xf32> to vector<8x32xf32>
    %32 = arith.addf %30, %31 : vector<8x32xf32>
    %c16_14 = arith.constant 16 : index
    %c0_15 = arith.constant 0 : index
    %33 = vector.load %arg1[%c16_14, %c0_15] : memref<152x32xf32, #tpu.memory_space<vmem>>, vector<32x32xf32>
    %c3 = arith.constant 3 : index
    %c0_16 = arith.constant 0 : index
    %34 = vector.load %arg2[%c3, %c0_16] : memref<14x32xf32, #tpu.memory_space<vmem>>, vector<1x32xf32>
    %cst_17 = arith.constant dense<0.000000e+00> : vector<8x32xf32>
    %35 = tpu.matmul %32, %33, %cst_17 {dimension_numbers = #tpu.dot_dimension_numbers<[1], [0], [0], [1], [0, 0, 1, 1], [], []>} : vector<8x32xf32>, vector<32x32xf32>, vector<8x32xf32> -> vector<8x32xf32>
    %36 = vector.broadcast %34 : vector<1x32xf32> to vector<8x32xf32>
    %37 = arith.addf %35, %36 : vector<8x32xf32>
    %cst_18 = arith.constant 0.000000e+00 : f32
    %38 = vector.broadcast %cst_18 : f32 to vector<8x32xf32>
    %39 = arith.maximumf %37, %38 : vector<8x32xf32>
    %cst_19 = arith.constant dense<0.000000e+00> : vector<32xf32>
    %40 = vector.multi_reduction <add>, %39, %cst_19 [0] : vector<8x32xf32> to vector<32xf32>
    %41 = vector.shape_cast %40 : vector<32xf32> to vector<1x32xf32>
    %cst_20 = arith.constant 1.250000e-01 : f32
    %42 = vector.broadcast %cst_20 : f32 to vector<1x32xf32>
    %43 = arith.mulf %41, %42 : vector<1x32xf32>
    %44 = arith.mulf %39, %39 : vector<8x32xf32>
    %cst_21 = arith.constant dense<0.000000e+00> : vector<32xf32>
    %45 = vector.multi_reduction <add>, %44, %cst_21 [0] : vector<8x32xf32> to vector<32xf32>
    %46 = vector.shape_cast %45 : vector<32xf32> to vector<1x32xf32>
    %cst_22 = arith.constant 1.250000e-01 : f32
    %47 = vector.broadcast %cst_22 : f32 to vector<1x32xf32>
    %48 = arith.mulf %46, %47 : vector<1x32xf32>
    %49 = arith.mulf %43, %43 : vector<1x32xf32>
    %50 = arith.subf %48, %49 : vector<1x32xf32>
    %c4 = arith.constant 4 : index
    %c0_23 = arith.constant 0 : index
    %51 = vector.load %arg2[%c4, %c0_23] : memref<14x32xf32, #tpu.memory_space<vmem>>, vector<1x32xf32>
    %c5 = arith.constant 5 : index
    %c0_24 = arith.constant 0 : index
    %52 = vector.load %arg2[%c5, %c0_24] : memref<14x32xf32, #tpu.memory_space<vmem>>, vector<1x32xf32>
    %53 = vector.broadcast %43 : vector<1x32xf32> to vector<8x32xf32>
    %54 = arith.subf %39, %53 : vector<8x32xf32>
    %55 = vector.broadcast %51 : vector<1x32xf32> to vector<8x32xf32>
    %56 = arith.mulf %55, %54 : vector<8x32xf32>
    %cst_25 = arith.constant 9.99999974E-6 : f32
    %57 = vector.broadcast %cst_25 : f32 to vector<1x32xf32>
    %58 = arith.addf %50, %57 : vector<1x32xf32>
    %59 = math.rsqrt %58 : vector<1x32xf32>
    %60 = vector.broadcast %59 : vector<1x32xf32> to vector<8x32xf32>
    %61 = arith.mulf %56, %60 : vector<8x32xf32>
    %62 = vector.broadcast %52 : vector<1x32xf32> to vector<8x32xf32>
    %63 = arith.addf %61, %62 : vector<8x32xf32>
    %c48 = arith.constant 48 : index
    %c0_26 = arith.constant 0 : index
    %64 = vector.load %arg1[%c48, %c0_26] : memref<152x32xf32, #tpu.memory_space<vmem>>, vector<32x16xf32>
    %c6 = arith.constant 6 : index
    %c0_27 = arith.constant 0 : index
    %65 = vector.load %arg2[%c6, %c0_27] : memref<14x32xf32, #tpu.memory_space<vmem>>, vector<1x16xf32>
    %cst_28 = arith.constant dense<0.000000e+00> : vector<8x16xf32>
    %66 = tpu.matmul %63, %64, %cst_28 {dimension_numbers = #tpu.dot_dimension_numbers<[1], [0], [0], [1], [0, 0, 1, 1], [], []>} : vector<8x32xf32>, vector<32x16xf32>, vector<8x16xf32> -> vector<8x16xf32>
    %67 = vector.broadcast %65 : vector<1x16xf32> to vector<8x16xf32>
    %68 = arith.addf %66, %67 : vector<8x16xf32>
    %69 = vector.extract_strided_slice %68 {offsets = [0, 0], sizes = [8, 8], strides = [1, 1]} : vector<8x16xf32> to vector<8x8xf32>
    %70 = vector.extract_strided_slice %68 {offsets = [0, 8], sizes = [8, 8], strides = [1, 1]} : vector<8x16xf32> to vector<8x8xf32>
    %cst_29 = arith.constant 5.000000e-01 : f32
    %71 = vector.broadcast %cst_29 : f32 to vector<8x8xf32>
    %72 = arith.mulf %71, %70 : vector<8x8xf32>
    %73 = math.exp %72 : vector<8x8xf32>
    %74 = arith.mulf %1, %73 : vector<8x8xf32>
    %75 = arith.addf %69, %74 : vector<8x8xf32>
    %c80 = arith.constant 80 : index
    %c0_30 = arith.constant 0 : index
    %76 = vector.load %arg1[%c80, %c0_30] : memref<152x32xf32, #tpu.memory_space<vmem>>, vector<8x32xf32>
    %c7 = arith.constant 7 : index
    %c0_31 = arith.constant 0 : index
    %77 = vector.load %arg2[%c7, %c0_31] : memref<14x32xf32, #tpu.memory_space<vmem>>, vector<1x32xf32>
    %cst_32 = arith.constant dense<0.000000e+00> : vector<8x32xf32>
    %78 = tpu.matmul %75, %76, %cst_32 {dimension_numbers = #tpu.dot_dimension_numbers<[1], [0], [0], [1], [0, 0, 1, 1], [], []>} : vector<8x8xf32>, vector<8x32xf32>, vector<8x32xf32> -> vector<8x32xf32>
    %79 = vector.broadcast %77 : vector<1x32xf32> to vector<8x32xf32>
    %80 = arith.addf %78, %79 : vector<8x32xf32>
    %cst_33 = arith.constant 0.000000e+00 : f32
    %81 = vector.broadcast %cst_33 : f32 to vector<8x32xf32>
    %82 = arith.maximumf %80, %81 : vector<8x32xf32>
    %cst_34 = arith.constant dense<0.000000e+00> : vector<32xf32>
    %83 = vector.multi_reduction <add>, %82, %cst_34 [0] : vector<8x32xf32> to vector<32xf32>
    %84 = vector.shape_cast %83 : vector<32xf32> to vector<1x32xf32>
    %cst_35 = arith.constant 1.250000e-01 : f32
    %85 = vector.broadcast %cst_35 : f32 to vector<1x32xf32>
    %86 = arith.mulf %84, %85 : vector<1x32xf32>
    %87 = arith.mulf %82, %82 : vector<8x32xf32>
    %cst_36 = arith.constant dense<0.000000e+00> : vector<32xf32>
    %88 = vector.multi_reduction <add>, %87, %cst_36 [0] : vector<8x32xf32> to vector<32xf32>
    %89 = vector.shape_cast %88 : vector<32xf32> to vector<1x32xf32>
    %cst_37 = arith.constant 1.250000e-01 : f32
    %90 = vector.broadcast %cst_37 : f32 to vector<1x32xf32>
    %91 = arith.mulf %89, %90 : vector<1x32xf32>
    %92 = arith.mulf %86, %86 : vector<1x32xf32>
    %93 = arith.subf %91, %92 : vector<1x32xf32>
    %c8 = arith.constant 8 : index
    %c0_38 = arith.constant 0 : index
    %94 = vector.load %arg2[%c8, %c0_38] : memref<14x32xf32, #tpu.memory_space<vmem>>, vector<1x32xf32>
    %c9 = arith.constant 9 : index
    %c0_39 = arith.constant 0 : index
    %95 = vector.load %arg2[%c9, %c0_39] : memref<14x32xf32, #tpu.memory_space<vmem>>, vector<1x32xf32>
    %96 = vector.broadcast %86 : vector<1x32xf32> to vector<8x32xf32>
    %97 = arith.subf %82, %96 : vector<8x32xf32>
    %98 = vector.broadcast %94 : vector<1x32xf32> to vector<8x32xf32>
    %99 = arith.mulf %98, %97 : vector<8x32xf32>
    %cst_40 = arith.constant 9.99999974E-6 : f32
    %100 = vector.broadcast %cst_40 : f32 to vector<1x32xf32>
    %101 = arith.addf %93, %100 : vector<1x32xf32>
    %102 = math.rsqrt %101 : vector<1x32xf32>
    %103 = vector.broadcast %102 : vector<1x32xf32> to vector<8x32xf32>
    %104 = arith.mulf %99, %103 : vector<8x32xf32>
    %105 = vector.broadcast %95 : vector<1x32xf32> to vector<8x32xf32>
    %106 = arith.addf %104, %105 : vector<8x32xf32>
    %c88 = arith.constant 88 : index
    %c0_41 = arith.constant 0 : index
    %107 = vector.load %arg1[%c88, %c0_41] : memref<152x32xf32, #tpu.memory_space<vmem>>, vector<32x32xf32>
    %c10 = arith.constant 10 : index
    %c0_42 = arith.constant 0 : index
    %108 = vector.load %arg2[%c10, %c0_42] : memref<14x32xf32, #tpu.memory_space<vmem>>, vector<1x32xf32>
    %cst_43 = arith.constant dense<0.000000e+00> : vector<8x32xf32>
    %109 = tpu.matmul %106, %107, %cst_43 {dimension_numbers = #tpu.dot_dimension_numbers<[1], [0], [0], [1], [0, 0, 1, 1], [], []>} : vector<8x32xf32>, vector<32x32xf32>, vector<8x32xf32> -> vector<8x32xf32>
    %110 = vector.broadcast %108 : vector<1x32xf32> to vector<8x32xf32>
    %111 = arith.addf %109, %110 : vector<8x32xf32>
    %cst_44 = arith.constant 0.000000e+00 : f32
    %112 = vector.broadcast %cst_44 : f32 to vector<8x32xf32>
    %113 = arith.maximumf %111, %112 : vector<8x32xf32>
    %cst_45 = arith.constant dense<0.000000e+00> : vector<32xf32>
    %114 = vector.multi_reduction <add>, %113, %cst_45 [0] : vector<8x32xf32> to vector<32xf32>
    %115 = vector.shape_cast %114 : vector<32xf32> to vector<1x32xf32>
    %cst_46 = arith.constant 1.250000e-01 : f32
    %116 = vector.broadcast %cst_46 : f32 to vector<1x32xf32>
    %117 = arith.mulf %115, %116 : vector<1x32xf32>
    %118 = arith.mulf %113, %113 : vector<8x32xf32>
    %cst_47 = arith.constant dense<0.000000e+00> : vector<32xf32>
    %119 = vector.multi_reduction <add>, %118, %cst_47 [0] : vector<8x32xf32> to vector<32xf32>
    %120 = vector.shape_cast %119 : vector<32xf32> to vector<1x32xf32>
    %cst_48 = arith.constant 1.250000e-01 : f32
    %121 = vector.broadcast %cst_48 : f32 to vector<1x32xf32>
    %122 = arith.mulf %120, %121 : vector<1x32xf32>
    %123 = arith.mulf %117, %117 : vector<1x32xf32>
    %124 = arith.subf %122, %123 : vector<1x32xf32>
    %c11 = arith.constant 11 : index
    %c0_49 = arith.constant 0 : index
    %125 = vector.load %arg2[%c11, %c0_49] : memref<14x32xf32, #tpu.memory_space<vmem>>, vector<1x32xf32>
    %c12 = arith.constant 12 : index
    %c0_50 = arith.constant 0 : index
    %126 = vector.load %arg2[%c12, %c0_50] : memref<14x32xf32, #tpu.memory_space<vmem>>, vector<1x32xf32>
    %127 = vector.broadcast %117 : vector<1x32xf32> to vector<8x32xf32>
    %128 = arith.subf %113, %127 : vector<8x32xf32>
    %129 = vector.broadcast %125 : vector<1x32xf32> to vector<8x32xf32>
    %130 = arith.mulf %129, %128 : vector<8x32xf32>
    %cst_51 = arith.constant 9.99999974E-6 : f32
    %131 = vector.broadcast %cst_51 : f32 to vector<1x32xf32>
    %132 = arith.addf %124, %131 : vector<1x32xf32>
    %133 = math.rsqrt %132 : vector<1x32xf32>
    %134 = vector.broadcast %133 : vector<1x32xf32> to vector<8x32xf32>
    %135 = arith.mulf %130, %134 : vector<8x32xf32>
    %136 = vector.broadcast %126 : vector<1x32xf32> to vector<8x32xf32>
    %137 = arith.addf %135, %136 : vector<8x32xf32>
    %c120 = arith.constant 120 : index
    %c0_52 = arith.constant 0 : index
    %138 = vector.load %arg1[%c120, %c0_52] : memref<152x32xf32, #tpu.memory_space<vmem>>, vector<32x16xf32>
    %c13 = arith.constant 13 : index
    %c0_53 = arith.constant 0 : index
    %139 = vector.load %arg2[%c13, %c0_53] : memref<14x32xf32, #tpu.memory_space<vmem>>, vector<1x16xf32>
    %cst_54 = arith.constant dense<0.000000e+00> : vector<8x16xf32>
    %140 = tpu.matmul %137, %138, %cst_54 {dimension_numbers = #tpu.dot_dimension_numbers<[1], [0], [0], [1], [0, 0, 1, 1], [], []>} : vector<8x32xf32>, vector<32x16xf32>, vector<8x16xf32> -> vector<8x16xf32>
    %141 = vector.broadcast %139 : vector<1x16xf32> to vector<8x16xf32>
    %142 = arith.addf %140, %141 : vector<8x16xf32>
    %143 = tpu.concatenate %142, %69, %70, %75 in 1 : vector<8x16xf32>, vector<8x8xf32>, vector<8x8xf32>, vector<8x8xf32> -> vector<8x40xf32>
    %c0_55 = arith.constant 0 : index
    %c0_56 = arith.constant 0 : index
    %144 = vector.load %arg3[%c0_55, %c0_56] : memref<8x40xf32, #tpu.memory_space<vmem>>, vector<8x40xf32>
    tpu.vector_store %arg3[%c0_55, %c0_56], %143 {strides = array<i32>} : memref<8x40xf32, #tpu.memory_space<vmem>>, vector<8x40xf32>,
    return
  }
}

</mosaic_0001>

<llo_original>
// kernel: tpu_custom_call.1
$region0: #{tpu_custom_call.1}
  #allocation0 [shape = 'u32[]', space=smem, size = 0x4, offset = 0x4, fixed_abs, tag = 'smem constant byte address 0x4 - core index']
  #allocation1 [shape = 'u32[144,128]{1,0:T(1,128)}', space=vmem, size = 0x12000, scoped, tag = 'internal scratch']
  %s0 = inlined_call_operand.vmem [shape: f32[8,24], index: 0, kind: input, shape index: {}]
  %s1 = inlined_call_operand.vmem [shape: f32[152,32], index: 1, kind: input, shape index: {}]
  %s2 = inlined_call_operand.vmem [shape: f32[14,32], index: 2, kind: input, shape index: {}]
  %s3 = inlined_call_operand.hbm [shape: f32[8,40], index: 3, kind: output, shape index: {}]
  %s4 = sld [smem:[#allocation0]]
  $region22: #{tpu_custom_call.1} parent=0
    _
  %s6 = ssub.s32 1, %s4
  %s7 = scalar_select 0, %s6, %s4
  $region1: #{tpu_custom_call.1} parent=0
    #allocation2 [shape = 'u8[4096]{0}', space=vmem, size = 0x1000, scoped, tag = 'output window, operand 0, single buffered']
    #allocation3 [shape = 's32[1]{0}', space=sflag, size = 0x4, scoped, tag = 'scoped memory for tpu_custom_call.1']
    %8 = vsyncpa [#allocation3], 0
    // Predicated region
    $region2: #{tpu_custom_call.1} parent=1 // pred_check
      _
    $region3: #{tpu_custom_call.1} parent=1 // pred_check_branch
      %10 = sbr.rel (0) target = $region5
    $region4: #{tpu_custom_call.1} parent=1 // pred_region
      _
    $region5: #{tpu_custom_call.1} parent=1 // pred_fallthru
      _
    // Predicated region
    $region6: #{tpu_custom_call.1} parent=1 // pred_check
      _
    $region7: #{tpu_custom_call.1} parent=1 // pred_check_branch
      %12 = sbr.rel (0) target = $region9
    $region8: #{tpu_custom_call.1} parent=1 // pred_region
      _
    $region9: #{tpu_custom_call.1} parent=1 // pred_fallthru
      _
    // Predicated region
    $region10: #{tpu_custom_call.1} parent=1 // pred_check
      _
    $region11: #{tpu_custom_call.1} parent=1 // pred_check_branch
      %14 = sbr.rel (0) target = $region13
    $region12: #{tpu_custom_call.1} parent=1 // pred_region
      _
    $region13: #{tpu_custom_call.1} parent=1 // pred_fallthru
      _
    %v15 = vld [vmem:[%s0] sm:$0xff]
    %v16 = vld [vmem:[%s1] sm:$0xff]
    %v17 = vld [vmem:[%s1 + $0x8] sm:$0xff]
    %v18 = vld [vmem:[%s2] sm:$0x1]
    %v19 = vlaneseq
    %v20 = vshrl.u32 %v19, 7
    %v21 = vsub.s32 0, %v20
    %v22 = vrot.slane %v18, %v21
    %vm23 = vcmask 130048
    %v25 = vsel %vm23, %v15, 0
    %27 = vmatprep.subr.mxu0 0.0
    %28 = vmatpush1.msra.mxu0 %v16
    %29 = vmatprep.subr.mxu0 0.0
    %30 = vmatpush1.msra.mxu0 %v17
    %31 = vmatprep.subr.mxu0 0.0
    %32 = vmatpush1.msra.mxu0 0.0
    %33 = vmatprep.subr.mxu0 0.0
    %34 = vmatpush1.msra.mxu0 0.0
    %35 = vmatprep.subr.mxu0 0.0
    %36 = vmatpush1.msra.mxu0 0.0
    %37 = vmatprep.subr.mxu0 0.0
    %38 = vmatpush1.msra.mxu0 0.0
    %39 = vmatprep.subr.mxu0 0.0
    %40 = vmatpush1.msra.mxu0 0.0
    %41 = vmatprep.subr.mxu0 0.0
    %42 = vmatpush1.msra.mxu0 0.0
    %43 = vmatprep.subr.mxu0 0.0
    %44 = vmatpush1.msra.mxu0 0.0
    %45 = vmatprep.subr.mxu0 0.0
    %46 = vmatpush1.msra.mxu0 0.0
    %47 = vmatprep.subr.mxu0 0.0
    %48 = vmatpush1.msra.mxu0 0.0
    %49 = vmatprep.subr.mxu0 0.0
    %50 = vmatpush1.msra.mxu0 0.0
    %51 = vmatprep.subr.mxu0 0.0
    %52 = vmatpush1.msra.mxu0 0.0
    %53 = vmatprep.subr.mxu0 0.0
    %54 = vmatpush1.msra.mxu0 0.0
    %55 = vmatprep.subr.mxu0 0.0
    %56 = vmatpush1.msra.mxu0 0.0
    %57 = vmatprep.subr.mxu0 0.0
    %58 = vmatpush1.msra.mxu0 0.0
    %59 = vmatprep.subr.mxu0 0.0
    %60 = vmatpush1.msra.mxu0 0.0
    %61 = vmatprep.subr.mxu0 0.0
    %62 = vmatpush1.msra.mxu0 0.0
    %63 = vmatprep.subr.mxu0 0.0
    %64 = vmatpush1.msra.mxu0 0.0
    %65 = vmatprep.subr.mxu0 0.0
    %66 = vmatpush1.msra.mxu0 0.0
    %67 = vmatprep.subr.mxu0 0.0
    %68 = vmatpush1.msra.mxu0 0.0
    %69 = vmatprep.subr.mxu0 0.0
    %70 = vmatpush1.msra.mxu0 0.0
    %71 = vmatprep.subr.mxu0 0.0
    %72 = vmatpush1.msra.mxu0 0.0
    %73 = vmatprep.subr.mxu0 0.0
    %74 = vmatpush1.msra.mxu0 0.0
    %75 = vmatprep.subr.mxu0 0.0
    %76 = vmatpush1.msra.mxu0 0.0
    %77 = vmatprep.subr.mxu0 0.0
    %78 = vmatpush1.msra.mxu0 0.0
    %79 = vmatprep.subr.mxu0 0.0
    %80 = vmatpush1.msra.mxu0 0.0
    %81 = vmatprep.subr.mxu0 0.0
    %82 = vmatpush1.msra.mxu0 0.0
    %83 = vmatprep.subr.mxu0 0.0
    %84 = vmatpush1.msra.mxu0 0.0
    %85 = vmatprep.subr.mxu0 0.0
    %86 = vmatpush1.msra.mxu0 0.0
    %87 = vmatprep.subr.mxu0 0.0
    %88 = vmatpush1.msra.mxu0 0.0
    %89 = vmatprep.subr.mxu0 0.0
    %90 = vmatpush1.msra.mxu0 0.0
    %91 = vmatprep.mubr.f32.mxu0 0.0
    %92 = vmatmul.mubr.f32.gmra.mrb[0].mxu0 %v25
    %v93 = vpop.f32.mrb[0].mxu0
    %v94 = vadd.f32 %v22, %v93
    %v95 = vpop.f32.mrb[0].mxu0
    %96 = vdwg.mxu0
    %v97 = vmax.f32 %v94, 0.0
    %vm98 = vcmask 261120
    %v99 = vsel %vm98, %v97, 0.0
    %v100 = vrot.slane %v99, 4
    %v101 = vadd.f32 %v99, %v100
    %v102 = vrot.slane %v101, 2
    %v103 = vadd.f32 %v101, %v102
    %v104 = vrot.slane %v103, 1
    %v105 = vadd.f32 %v103, %v104
    %v106 = vmul.f32 %v105, 0.125
    %v107 = vmul.f32 %v97, %v97
    %v108 = vsel %vm98, %v107, 0.0
    %v109 = vrot.slane %v108, 4
    %v110 = vadd.f32 %v108, %v109
    %v111 = vrot.slane %v110, 2
    %v112 = vadd.f32 %v110, %v111
    %v113 = vrot.slane %v112, 1
    %v114 = vadd.f32 %v112, %v113
    %v115 = vmul.f32 %v114, 0.125
    %v116 = vmul.f32 %v106, %v106
    %v117 = vsub.f32 %v115, %v116
    %v118 = vld [vmem:[%s2 + $0x1] sm:$0x1]
    %v119 = vld [vmem:[%s2 + $0x2] sm:$0x1]
    %v120 = vsub.f32 %v97, %v106
    %v121 = vlaneseq
    %v122 = vshrl.u32 %v121, 7
    %v123 = vsub.s32 0, %v122
    %v124 = vrot.slane %v118, %v123
    %v125 = vmul.f32 %v124, %v120
    %v126 = vadd.f32 %v117, 1e-05
    %v127 = vrsqrt.pop %v126
    %v128 = vmul.f32 %v125, %v127
    %v129 = vlaneseq
    %v130 = vshrl.u32 %v129, 7
    %v131 = vsub.s32 0, %v130
    %v132 = vrot.slane %v119, %v131
    %v133 = vadd.f32 %v128, %v132
    %v134 = vld [vmem:[%s1 + $0x10] sm:$0xff]
    %v135 = vld [vmem:[%s1 + $0x18] sm:$0xff]
    %v136 = vld [vmem:[%s1 + $0x20] sm:$0xff]
    %v137 = vld [vmem:[%s1 + $0x28] sm:$0xff]
    %v138 = vld [vmem:[%s2 + $0x3] sm:$0x1]
    %v139 = vlaneseq
    %v140 = vshrl.u32 %v139, 7
    %v141 = vsub.s32 0, %v140
    %v142 = vrot.slane %v138, %v141
    %v144 = vsel %vm98, %v133, 0
    %146 = vmatprep.subr.mxu0 0.0
    %147 = vmatpush1.msra.mxu0 %v134
    %148 = vmatprep.subr.mxu0 0.0
    %149 = vmatpush1.msra.mxu0 %v135
    %150 = vmatprep.subr.mxu0 0.0
    %151 = vmatpush1.msra.mxu0 %v136
    %152 = vmatprep.subr.mxu0 0.0
    %153 = vmatpush1.msra.mxu0 %v137
    %154 = vmatprep.subr.mxu0 0.0
    %155 = vmatpush1.msra.mxu0 0.0
    %156 = vmatprep.subr.mxu0 0.0
    %157 = vmatpush1.msra.mxu0 0.0
    %158 = vmatprep.subr.mxu0 0.0
    %159 = vmatpush1.msra.mxu0 0.0
    %160 = vmatprep.subr.mxu0 0.0
    %161 = vmatpush1.msra.mxu0 0.0
    %162 = vmatprep.subr.mxu0 0.0
    %163 = vmatpush1.msra.mxu0 0.0
    %164 = vmatprep.subr.mxu0 0.0
    %165 = vmatpush1.msra.mxu0 0.0
    %166 = vmatprep.subr.mxu0 0.0
    %167 = vmatpush1.msra.mxu0 0.0
    %168 = vmatprep.subr.mxu0 0.0
    %169 = vmatpush1.msra.mxu0 0.0
    %170 = vmatprep.subr.mxu0 0.0
    %171 = vmatpush1.msra.mxu0 0.0
    %172 = vmatprep.subr.mxu0 0.0
    %173 = vmatpush1.msra.mxu0 0.0
    %174 = vmatprep.subr.mxu0 0.0
    %175 = vmatpush1.msra.mxu0 0.0
    %176 = vmatprep.subr.mxu0 0.0
    %177 = vmatpush1.msra.mxu0 0.0
    %178 = vmatprep.subr.mxu0 0.0
    %179 = vmatpush1.msra.mxu0 0.0
    %180 = vmatprep.subr.mxu0 0.0
    %181 = vmatpush1.msra.mxu0 0.0
    %182 = vmatprep.subr.mxu0 0.0
    %183 = vmatpush1.msra.mxu0 0.0
    %184 = vmatprep.subr.mxu0 0.0
    %185 = vmatpush1.msra.mxu0 0.0
    %186 = vmatprep.subr.mxu0 0.0
    %187 = vmatpush1.msra.mxu0 0.0
    %188 = vmatprep.subr.mxu0 0.0
    %189 = vmatpush1.msra.mxu0 0.0
    %190 = vmatprep.subr.mxu0 0.0
    %191 = vmatpush1.msra.mxu0 0.0
    %192 = vmatprep.subr.mxu0 0.0
    %193 = vmatpush1.msra.mxu0 0.0
    %194 = vmatprep.subr.mxu0 0.0
    %195 = vmatpush1.msra.mxu0 0.0
    %196 = vmatprep.subr.mxu0 0.0
    %197 = vmatpush1.msra.mxu0 0.0
    %198 = vmatprep.subr.mxu0 0.0
    %199 = vmatpush1.msra.mxu0 0.0
    %200 = vmatprep.subr.mxu0 0.0
    %201 = vmatpush1.msra.mxu0 0.0
    %202 = vmatprep.subr.mxu0 0.0
    %203 = vmatpush1.msra.mxu0 0.0
    %204 = vmatprep.subr.mxu0 0.0
    %205 = vmatpush1.msra.mxu0 0.0
    %206 = vmatprep.subr.mxu0 0.0
    %207 = vmatpush1.msra.mxu0 0.0
    %208 = vmatprep.subr.mxu0 0.0
    %209 = vmatpush1.msra.mxu0 0.0
    %210 = vmatprep.mubr.f32.mxu0 0.0
    %211 = vmatmul.mubr.f32.gmra.mrb[0].mxu0 %v144
    %v212 = vpop.f32.mrb[0].mxu0
    %v213 = vadd.f32 %v142, %v212
    %v214 = vpop.f32.mrb[0].mxu0
    %215 = vdwg.mxu0
    %v216 = vmax.f32 %v213, 0.0
    %v217 = vsel %vm98, %v216, 0.0
    %v218 = vrot.slane %v217, 4
    %v219 = vadd.f32 %v217, %v218
    %v220 = vrot.slane %v219, 2
    %v221 = vadd.f32 %v219, %v220
    %v222 = vrot.slane %v221, 1
    %v223 = vadd.f32 %v221, %v222
    %v224 = vmul.f32 %v223, 0.125
    %v225 = vmul.f32 %v216, %v216
    %v226 = vsel %vm98, %v225, 0.0
    %v227 = vrot.slane %v226, 4
    %v228 = vadd.f32 %v226, %v227
    %v229 = vrot.slane %v228, 2
    %v230 = vadd.f32 %v228, %v229
    %v231 = vrot.slane %v230, 1
    %v232 = vadd.f32 %v230, %v231
    %v233 = vmul.f32 %v232, 0.125
    %v234 = vmul.f32 %v224, %v224
    %v235 = vsub.f32 %v233, %v234
    %v236 = vld [vmem:[%s2 + $0x4] sm:$0x1]
    %v237 = vld [vmem:[%s2 + $0x5] sm:$0x1]
    %v238 = vsub.f32 %v216, %v224
    %v239 = vlaneseq
    %v240 = vshrl.u32 %v239, 7
    %v241 = vsub.s32 0, %v240
    %v242 = vrot.slane %v236, %v241
    %v243 = vmul.f32 %v242, %v238
    %v244 = vadd.f32 %v235, 1e-05
    %v245 = vrsqrt.pop %v244
    %v246 = vmul.f32 %v243, %v245
    %v247 = vlaneseq
    %v248 = vshrl.u32 %v247, 7
    %v249 = vsub.s32 0, %v248
    %v250 = vrot.slane %v237, %v249
    %v251 = vadd.f32 %v246, %v250
    %v252 = vld [vmem:[%s1 + $0x30] sm:$0xff]
    %v253 = vld [vmem:[%s1 + $0x38] sm:$0xff]
    %v254 = vld [vmem:[%s1 + $0x40] sm:$0xff]
    %v255 = vld [vmem:[%s1 + $0x48] sm:$0xff]
    %v256 = vld [vmem:[%s2 + $0x6] sm:$0x1]
    %v257 = vlaneseq
    %v258 = vshrl.u32 %v257, 7
    %v259 = vsub.s32 0, %v258
    %v260 = vrot.slane %v256, %v259
    %v262 = vsel %vm98, %v251, 0
    %264 = vmatprep.subr.mxu0 0.0
    %265 = vmatpush1.msra.mxu0 %v252
    %266 = vmatprep.subr.mxu0 0.0
    %267 = vmatpush1.msra.mxu0 %v253
    %268 = vmatprep.subr.mxu0 0.0
    %269 = vmatpush1.msra.mxu0 %v254
    %270 = vmatprep.subr.mxu0 0.0
    %271 = vmatpush1.msra.mxu0 %v255
    %272 = vmatprep.subr.mxu0 0.0
    %273 = vmatpush1.msra.mxu0 0.0
    %274 = vmatprep.subr.mxu0 0.0
    %275 = vmatpush1.msra.mxu0 0.0
    %276 = vmatprep.subr.mxu0 0.0
    %277 = vmatpush1.msra.mxu0 0.0
    %278 = vmatprep.subr.mxu0 0.0
    %279 = vmatpush1.msra.mxu0 0.0
    %280 = vmatprep.subr.mxu0 0.0
    %281 = vmatpush1.msra.mxu0 0.0
    %282 = vmatprep.subr.mxu0 0.0
    %283 = vmatpush1.msra.mxu0 0.0
    %284 = vmatprep.subr.mxu0 0.0
    %285 = vmatpush1.msra.mxu0 0.0
    %286 = vmatprep.subr.mxu0 0.0
    %287 = vmatpush1.msra.mxu0 0.0
    %288 = vmatprep.subr.mxu0 0.0
    %289 = vmatpush1.msra.mxu0 0.0
    %290 = vmatprep.subr.mxu0 0.0
    %291 = vmatpush1.msra.mxu0 0.0
    %292 = vmatprep.subr.mxu0 0.0
    %293 = vmatpush1.msra.mxu0 0.0
    %294 = vmatprep.subr.mxu0 0.0
    %295 = vmatpush1.msra.mxu0 0.0
    %296 = vmatprep.subr.mxu0 0.0
    %297 = vmatpush1.msra.mxu0 0.0
    %298 = vmatprep.subr.mxu0 0.0
    %299 = vmatpush1.msra.mxu0 0.0
    %300 = vmatprep.subr.mxu0 0.0
    %301 = vmatpush1.msra.mxu0 0.0
    %302 = vmatprep.subr.mxu0 0.0
    %303 = vmatpush1.msra.mxu0 0.0
    %304 = vmatprep.subr.mxu0 0.0
    %305 = vmatpush1.msra.mxu0 0.0
    %306 = vmatprep.subr.mxu0 0.0
    %307 = vmatpush1.msra.mxu0 0.0
    %308 = vmatprep.subr.mxu0 0.0
    %309 = vmatpush1.msra.mxu0 0.0
    %310 = vmatprep.subr.mxu0 0.0
    %311 = vmatpush1.msra.mxu0 0.0
    %312 = vmatprep.subr.mxu0 0.0
    %313 = vmatpush1.msra.mxu0 0.0
    %314 = vmatprep.subr.mxu0 0.0
    %315 = vmatpush1.msra.mxu0 0.0
    %316 = vmatprep.subr.mxu0 0.0
    %317 = vmatpush1.msra.mxu0 0.0
    %318 = vmatprep.subr.mxu0 0.0
    %319 = vmatpush1.msra.mxu0 0.0
    %320 = vmatprep.subr.mxu0 0.0
    %321 = vmatpush1.msra.mxu0 0.0
    %322 = vmatprep.subr.mxu0 0.0
    %323 = vmatpush1.msra.mxu0 0.0
    %324 = vmatprep.subr.mxu0 0.0
    %325 = vmatpush1.msra.mxu0 0.0
    %326 = vmatprep.subr.mxu0 0.0
    %327 = vmatpush1.msra.mxu0 0.0
    %328 = vmatprep.mubr.f32.mxu0 0.0
    %329 = vmatmul.mubr.f32.gmra.mrb[0].mxu0 %v262
    %v330 = vpop.f32.mrb[0].mxu0
    %v331 = vadd.f32 %v260, %v330
    %v332 = vpop.f32.mrb[0].mxu0
    %333 = vdwg.mxu0
    %v334 = vmul.f32 %v331, 0.5
    %v335 = vmul.f32 %v334, 1.442695
    %v336 = vpow.pop %v335
    %338 = vrot.lane.b32.xlu0 %v336, 8
    %v339 = vpop.permute.xlu0 %338
    %v341 = vmul.f32 %v15, %v339
    %343 = vrot.lane.b32.xlu0 %v341, 112
    %v344 = vpop.permute.xlu0 %343
    %v346 = vadd.f32 %v331, %v344
    %v347 = vld [vmem:[%s1 + $0x50] sm:$0xff]
    %v348 = vld [vmem:[%s2 + $0x7] sm:$0x1]
    %v349 = vlaneseq
    %v350 = vshrl.u32 %v349, 7
    %v351 = vsub.s32 0, %v350
    %v352 = vrot.slane %v348, %v351
    %vm353 = vcmask 64512
    %v355 = vsel %vm353, %v346, 0
    %357 = vmatprep.subr.mxu0 0.0
    %358 = vmatpush1.msra.mxu0 %v347
    %359 = vmatprep.subr.mxu0 0.0
    %360 = vmatpush1.msra.mxu0 0.0
    %361 = vmatprep.subr.mxu0 0.0
    %362 = vmatpush1.msra.mxu0 0.0
    %363 = vmatprep.subr.mxu0 0.0
    %364 = vmatpush1.msra.mxu0 0.0
    %365 = vmatprep.subr.mxu0 0.0
    %366 = vmatpush1.msra.mxu0 0.0
    %367 = vmatprep.subr.mxu0 0.0
    %368 = vmatpush1.msra.mxu0 0.0
    %369 = vmatprep.subr.mxu0 0.0
    %370 = vmatpush1.msra.mxu0 0.0
    %371 = vmatprep.subr.mxu0 0.0
    %372 = vmatpush1.msra.mxu0 0.0
    %373 = vmatprep.subr.mxu0 0.0
    %374 = vmatpush1.msra.mxu0 0.0
    %375 = vmatprep.subr.mxu0 0.0
    %376 = vmatpush1.msra.mxu0 0.0
    %377 = vmatprep.subr.mxu0 0.0
    %378 = vmatpush1.msra.mxu0 0.0
    %379 = vmatprep.subr.mxu0 0.0
    %380 = vmatpush1.msra.mxu0 0.0
    %381 = vmatprep.subr.mxu0 0.0
    %382 = vmatpush1.msra.mxu0 0.0
    %383 = vmatprep.subr.mxu0 0.0
    %384 = vmatpush1.msra.mxu0 0.0
    %385 = vmatprep.subr.mxu0 0.0
    %386 = vmatpush1.msra.mxu0 0.0
    %387 = vmatprep.subr.mxu0 0.0
    %388 = vmatpush1.msra.mxu0 0.0
    %389 = vmatprep.subr.mxu0 0.0
    %390 = vmatpush1.msra.mxu0 0.0
    %391 = vmatprep.subr.mxu0 0.0
    %392 = vmatpush1.msra.mxu0 0.0
    %393 = vmatprep.subr.mxu0 0.0
    %394 = vmatpush1.msra.mxu0 0.0
    %395 = vmatprep.subr.mxu0 0.0
    %396 = vmatpush1.msra.mxu0 0.0
    %397 = vmatprep.subr.mxu0 0.0
    %398 = vmatpush1.msra.mxu0 0.0
    %399 = vmatprep.subr.mxu0 0.0
    %400 = vmatpush1.msra.mxu0 0.0
    %401 = vmatprep.subr.mxu0 0.0
    %402 = vmatpush1.msra.mxu0 0.0
    %403 = vmatprep.subr.mxu0 0.0
    %404 = vmatpush1.msra.mxu0 0.0
    %405 = vmatprep.subr.mxu0 0.0
    %406 = vmatpush1.msra.mxu0 0.0
    %407 = vmatprep.subr.mxu0 0.0
    %408 = vmatpush1.msra.mxu0 0.0
    %409 = vmatprep.subr.mxu0 0.0
    %410 = vmatpush1.msra.mxu0 0.0
    %411 = vmatprep.subr.mxu0 0.0
    %412 = vmatpush1.msra.mxu0 0.0
    %413 = vmatprep.subr.mxu0 0.0
    %414 = vmatpush1.msra.mxu0 0.0
    %415 = vmatprep.subr.mxu0 0.0
    %416 = vmatpush1.msra.mxu0 0.0
    %417 = vmatprep.subr.mxu0 0.0
    %418 = vmatpush1.msra.mxu0 0.0
    %419 = vmatprep.subr.mxu0 0.0
    %420 = vmatpush1.msra.mxu0 0.0
    %421 = vmatprep.mubr.f32.mxu0 0.0
    %422 = vmatmul.mubr.f32.gmra.mrb[0].mxu0 %v355
    %v423 = vpop.f32.mrb[0].mxu0
    %v424 = vadd.f32 %v352, %v423
    %v425 = vpop.f32.mrb[0].mxu0
    %426 = vdwg.mxu0
    %v427 = vmax.f32 %v424, 0.0
    %v428 = vsel %vm98, %v427, 0.0
    %v429 = vrot.slane %v428, 4
    %v430 = vadd.f32 %v428, %v429
    %v431 = vrot.slane %v430, 2
    %v432 = vadd.f32 %v430, %v431
    %v433 = vrot.slane %v432, 1
    %v434 = vadd.f32 %v432, %v433
    %v435 = vmul.f32 %v434, 0.125
    %v436 = vmul.f32 %v427, %v427
    %v437 = vsel %vm98, %v436, 0.0
    %v438 = vrot.slane %v437, 4
    %v439 = vadd.f32 %v437, %v438
    %v440 = vrot.slane %v439, 2
    %v441 = vadd.f32 %v439, %v440
    %v442 = vrot.slane %v441, 1
    %v443 = vadd.f32 %v441, %v442
    %v444 = vmul.f32 %v443, 0.125
    %v445 = vmul.f32 %v435, %v435
    %v446 = vsub.f32 %v444, %v445
    %v447 = vld [vmem:[%s2 + $0x8] sm:$0x1]
    %v448 = vld [vmem:[%s2 + $0x9] sm:$0x1]
    %v449 = vsub.f32 %v427, %v435
    %v450 = vlaneseq
    %v451 = vshrl.u32 %v450, 7
    %v452 = vsub.s32 0, %v451
    %v453 = vrot.slane %v447, %v452
    %v454 = vmul.f32 %v453, %v449
    %v455 = vadd.f32 %v446, 1e-05
    %v456 = vrsqrt.pop %v455
    %v457 = vmul.f32 %v454, %v456
    %v458 = vlaneseq
    %v459 = vshrl.u32 %v458, 7
    %v460 = vsub.s32 0, %v459
    %v461 = vrot.slane %v448, %v460
    %v462 = vadd.f32 %v457, %v461
    %v463 = vld [vmem:[%s1 + $0x58] sm:$0xff]
    %v464 = vld [vmem:[%s1 + $0x60] sm:$0xff]
    %v465 = vld [vmem:[%s1 + $0x68] sm:$0xff]
    %v466 = vld [vmem:[%s1 + $0x70] sm:$0xff]
    %v467 = vld [vmem:[%s2 + $0xa] sm:$0x1]
    %v468 = vlaneseq
    %v469 = vshrl.u32 %v468, 7
    %v470 = vsub.s32 0, %v469
    %v471 = vrot.slane %v467, %v470
    %v473 = vsel %vm98, %v462, 0
    %475 = vmatprep.subr.mxu0 0.0
    %476 = vmatpush1.msra.mxu0 %v463
    %477 = vmatprep.subr.mxu0 0.0
    %478 = vmatpush1.msra.mxu0 %v464
    %479 = vmatprep.subr.mxu0 0.0
    %480 = vmatpush1.msra.mxu0 %v465
    %481 = vmatprep.subr.mxu0 0.0
    %482 = vmatpush1.msra.mxu0 %v466
    %483 = vmatprep.subr.mxu0 0.0
    %484 = vmatpush1.msra.mxu0 0.0
    %485 = vmatprep.subr.mxu0 0.0
    %486 = vmatpush1.msra.mxu0 0.0
    %487 = vmatprep.subr.mxu0 0.0
    %488 = vmatpush1.msra.mxu0 0.0
    %489 = vmatprep.subr.mxu0 0.0
    %490 = vmatpush1.msra.mxu0 0.0
    %491 = vmatprep.subr.mxu0 0.0
    %492 = vmatpush1.msra.mxu0 0.0
    %493 = vmatprep.subr.mxu0 0.0
    %494 = vmatpush1.msra.mxu0 0.0
    %495 = vmatprep.subr.mxu0 0.0
    %496 = vmatpush1.msra.mxu0 0.0
    %497 = vmatprep.subr.mxu0 0.0
    %498 = vmatpush1.msra.mxu0 0.0
    %499 = vmatprep.subr.mxu0 0.0
    %500 = vmatpush1.msra.mxu0 0.0
    %501 = vmatprep.subr.mxu0 0.0
    %502 = vmatpush1.msra.mxu0 0.0
    %503 = vmatprep.subr.mxu0 0.0
    %504 = vmatpush1.msra.mxu0 0.0
    %505 = vmatprep.subr.mxu0 0.0
    %506 = vmatpush1.msra.mxu0 0.0
    %507 = vmatprep.subr.mxu0 0.0
    %508 = vmatpush1.msra.mxu0 0.0
    %509 = vmatprep.subr.mxu0 0.0
    %510 = vmatpush1.msra.mxu0 0.0
    %511 = vmatprep.subr.mxu0 0.0
    %512 = vmatpush1.msra.mxu0 0.0
    %513 = vmatprep.subr.mxu0 0.0
    %514 = vmatpush1.msra.mxu0 0.0
    %515 = vmatprep.subr.mxu0 0.0
    %516 = vmatpush1.msra.mxu0 0.0
    %517 = vmatprep.subr.mxu0 0.0
    %518 = vmatpush1.msra.mxu0 0.0
    %519 = vmatprep.subr.mxu0 0.0
    %520 = vmatpush1.msra.mxu0 0.0
    %521 = vmatprep.subr.mxu0 0.0
    %522 = vmatpush1.msra.mxu0 0.0
    %523 = vmatprep.subr.mxu0 0.0
    %524 = vmatpush1.msra.mxu0 0.0
    %525 = vmatprep.subr.mxu0 0.0
    %526 = vmatpush1.msra.mxu0 0.0
    %527 = vmatprep.subr.mxu0 0.0
    %528 = vmatpush1.msra.mxu0 0.0
    %529 = vmatprep.subr.mxu0 0.0
    %530 = vmatpush1.msra.mxu0 0.0
    %531 = vmatprep.subr.mxu0 0.0
    %532 = vmatpush1.msra.mxu0 0.0
    %533 = vmatprep.subr.mxu0 0.0
    %534 = vmatpush1.msra.mxu0 0.0
    %535 = vmatprep.subr.mxu0 0.0
    %536 = vmatpush1.msra.mxu0 0.0
    %537 = vmatprep.subr.mxu0 0.0
    %538 = vmatpush1.msra.mxu0 0.0
    %539 = vmatprep.mubr.f32.mxu0 0.0
    %540 = vmatmul.mubr.f32.gmra.mrb[0].mxu0 %v473
    %v541 = vpop.f32.mrb[0].mxu0
    %v542 = vadd.f32 %v471, %v541
    %v543 = vpop.f32.mrb[0].mxu0
    %544 = vdwg.mxu0
    %v545 = vmax.f32 %v542, 0.0
    %v546 = vsel %vm98, %v545, 0.0
    %v547 = vrot.slane %v546, 4
    %v548 = vadd.f32 %v546, %v547
    %v549 = vrot.slane %v548, 2
    %v550 = vadd.f32 %v548, %v549
    %v551 = vrot.slane %v550, 1
    %v552 = vadd.f32 %v550, %v551
    %v553 = vmul.f32 %v552, 0.125
    %v554 = vmul.f32 %v545, %v545
    %v555 = vsel %vm98, %v554, 0.0
    %v556 = vrot.slane %v555, 4
    %v557 = vadd.f32 %v555, %v556
    %v558 = vrot.slane %v557, 2
    %v559 = vadd.f32 %v557, %v558
    %v560 = vrot.slane %v559, 1
    %v561 = vadd.f32 %v559, %v560
    %v562 = vmul.f32 %v561, 0.125
    %v563 = vmul.f32 %v553, %v553
    %v564 = vsub.f32 %v562, %v563
    %v565 = vld [vmem:[%s2 + $0xb] sm:$0x1]
    %v566 = vld [vmem:[%s2 + $0xc] sm:$0x1]
    %v567 = vsub.f32 %v545, %v553
    %v568 = vlaneseq
    %v569 = vshrl.u32 %v568, 7
    %v570 = vsub.s32 0, %v569
    %v571 = vrot.slane %v565, %v570
    %v572 = vmul.f32 %v571, %v567
    %v573 = vadd.f32 %v564, 1e-05
    %v574 = vrsqrt.pop %v573
    %v575 = vmul.f32 %v572, %v574
    %v576 = vlaneseq
    %v577 = vshrl.u32 %v576, 7
    %v578 = vsub.s32 0, %v577
    %v579 = vrot.slane %v566, %v578
    %v580 = vadd.f32 %v575, %v579
    %v581 = vld [vmem:[%s1 + $0x78] sm:$0xff]
    %v582 = vld [vmem:[%s1 + $0x80] sm:$0xff]
    %v583 = vld [vmem:[%s1 + $0x88] sm:$0xff]
    %v584 = vld [vmem:[%s1 + $0x90] sm:$0xff]
    %v585 = vld [vmem:[%s2 + $0xd] sm:$0x1]
    %v586 = vlaneseq
    %v587 = vshrl.u32 %v586, 7
    %v588 = vsub.s32 0, %v587
    %v589 = vrot.slane %v585, %v588
    %v591 = vsel %vm98, %v580, 0
    %593 = vmatprep.subr.mxu0 0.0
    %594 = vmatpush1.msra.mxu0 %v581
    %595 = vmatprep.subr.mxu0 0.0
    %596 = vmatpush1.msra.mxu0 %v582
    %597 = vmatprep.subr.mxu0 0.0
    %598 = vmatpush1.msra.mxu0 %v583
    %599 = vmatprep.subr.mxu0 0.0
    %600 = vmatpush1.msra.mxu0 %v584
    %601 = vmatprep.subr.mxu0 0.0
    %602 = vmatpush1.msra.mxu0 0.0
    %603 = vmatprep.subr.mxu0 0.0
    %604 = vmatpush1.msra.mxu0 0.0
    %605 = vmatprep.subr.mxu0 0.0
    %606 = vmatpush1.msra.mxu0 0.0
    %607 = vmatprep.subr.mxu0 0.0
    %608 = vmatpush1.msra.mxu0 0.0
    %609 = vmatprep.subr.mxu0 0.0
    %610 = vmatpush1.msra.mxu0 0.0
    %611 = vmatprep.subr.mxu0 0.0
    %612 = vmatpush1.msra.mxu0 0.0
    %613 = vmatprep.subr.mxu0 0.0
    %614 = vmatpush1.msra.mxu0 0.0
    %615 = vmatprep.subr.mxu0 0.0
    %616 = vmatpush1.msra.mxu0 0.0
    %617 = vmatprep.subr.mxu0 0.0
    %618 = vmatpush1.msra.mxu0 0.0
    %619 = vmatprep.subr.mxu0 0.0
    %620 = vmatpush1.msra.mxu0 0.0
    %621 = vmatprep.subr.mxu0 0.0
    %622 = vmatpush1.msra.mxu0 0.0
    %623 = vmatprep.subr.mxu0 0.0
    %624 = vmatpush1.msra.mxu0 0.0
    %625 = vmatprep.subr.mxu0 0.0
    %626 = vmatpush1.msra.mxu0 0.0
    %627 = vmatprep.subr.mxu0 0.0
    %628 = vmatpush1.msra.mxu0 0.0
    %629 = vmatprep.subr.mxu0 0.0
    %630 = vmatpush1.msra.mxu0 0.0
    %631 = vmatprep.subr.mxu0 0.0
    %632 = vmatpush1.msra.mxu0 0.0
    %633 = vmatprep.subr.mxu0 0.0
    %634 = vmatpush1.msra.mxu0 0.0
    %635 = vmatprep.subr.mxu0 0.0
    %636 = vmatpush1.msra.mxu0 0.0
    %637 = vmatprep.subr.mxu0 0.0
    %638 = vmatpush1.msra.mxu0 0.0
    %639 = vmatprep.subr.mxu0 0.0
    %640 = vmatpush1.msra.mxu0 0.0
    %641 = vmatprep.subr.mxu0 0.0
    %642 = vmatpush1.msra.mxu0 0.0
    %643 = vmatprep.subr.mxu0 0.0
    %644 = vmatpush1.msra.mxu0 0.0
    %645 = vmatprep.subr.mxu0 0.0
    %646 = vmatpush1.msra.mxu0 0.0
    %647 = vmatprep.subr.mxu0 0.0
    %648 = vmatpush1.msra.mxu0 0.0
    %649 = vmatprep.subr.mxu0 0.0
    %650 = vmatpush1.msra.mxu0 0.0
    %651 = vmatprep.subr.mxu0 0.0
    %652 = vmatpush1.msra.mxu0 0.0
    %653 = vmatprep.subr.mxu0 0.0
    %654 = vmatpush1.msra.mxu0 0.0
    %655 = vmatprep.subr.mxu0 0.0
    %656 = vmatpush1.msra.mxu0 0.0
    %657 = vmatprep.mubr.f32.mxu0 0.0
    %658 = vmatmul.mubr.f32.gmra.mrb[0].mxu0 %v591
    %v659 = vpop.f32.mrb[0].mxu0
    %v660 = vadd.f32 %v589, %v659
    %v661 = vpop.f32.mrb[0].mxu0
    %662 = vdwg.mxu0
    %664 = vrot.lane.b32.xlu0 %v331, 16
    %v665 = vpop.permute.xlu0 %664
    %667 = vrot.lane.b32.xlu0 %v346, 32
    %v668 = vpop.permute.xlu0 %667
    %v670 = vsel %vm23, %v660, %v665
    %vm671 = vcmask 195584
    %v672 = vsel %vm671, %v670, %v665
    %v673 = vsel %vm98, %v672, %v668
    %vm674 = vcmask 326656
    %675 = vst.msk [vmem:[#allocation2] sm:$0xff] %vm674, %v673
    // Predicated region
    $region14: #{tpu_custom_call.1} parent=1 // pred_check
      _
    $region15: #{tpu_custom_call.1} parent=1 // pred_check_branch
      %677 = sbr.rel (0) target = $region17
    $region16: #{tpu_custom_call.1} parent=1 // pred_region
      %s679 = ssub.s32 128, 128
      %680 = vsyncadd [#allocation3], %s679
      %s682 = sshll.u32 [#allocation2], 4
      %s683 = int_to_ptr.vmem [resolvable:$true] %s682
      %685 = dma.vmem_to_hbm [thread:$0]  %s683, 128, %s3, [#allocation3]
    $region17: #{tpu_custom_call.1} parent=1 // pred_fallthru
      _
    // Predicated region
    $region18: #{tpu_custom_call.1} parent=1 // pred_check
      _
    $region19: #{tpu_custom_call.1} parent=1 // pred_check_branch
      %687 = sbr.rel (0) target = $region21
    $region20: #{tpu_custom_call.1} parent=1 // pred_region
      %688 = dma.done [#allocation3], 128
    $region21: #{tpu_custom_call.1} parent=1 // pred_fallthru
      _
    %689 = vsyncpa [#allocation3], 1

</llo_original>
